<compile_context>
chip_gen: v7x
topology: tpu7x:2x2x1
jax: 0.10.0
libtpu: 0.0.40
codegen_flags: <defaults>
</compile_context>

<pallas_src>
import math

import jax
import jax.numpy as jnp
from jax import lax
from jax.experimental import pallas as pl
from jax.experimental.pallas import tpu as pltpu


# Contract lhs dim 1 with rhs dim 1, i.e. A @ B^T (same pattern as the TPU
# flash-attention kernel's q @ k^T; the large (chunk, K) operand stays in its
# HBM batch-major layout, only the tiny weights were relaid out once).
_TRANS_B = (((1,), (1,)), ((), ()))


def _make_mlp_kernel(chunk: int, n_chunks: int):
    """Kernel factory.  The BlockSpec batch tile is chunk*n_chunks lanes wide
    (one large DMA), but compute runs over `chunk`-lane pieces so live
    activations stay well inside the 64-entry vreg file (no spills)."""

    def kernel(s_ref, a_ref, ns_ref, d_ref,
               w1s_ref, w1a_ref, w1ns_ref, w1d_ref, b1_ref,
               w2_ref, b2_ref, w3_ref, b3_ref,
               o_ref):
        # Tiny weights: loaded once per grid step, hoisted out of the chunk loop.
        w1s, w1a, w1ns = w1s_ref[...], w1a_ref[...], w1ns_ref[...]
        w1d, b1 = w1d_ref[...], b1_ref[...]
        w2, b2 = w2_ref[...], b2_ref[...]
        w3, b3 = w3_ref[...], b3_ref[...]

        # Statically unrolled chunk loop (equivalent to
        # lax.fori_loop(..., unroll=True) but with constant, 128-aligned
        # offsets so every lane-dim slice/store lowers to plain vld/vst).
        for c in range(n_chunks):
            off = c * chunk
            # Upcast per chunk: supports bf16 inputs (halved HBM reads) and is
            # a no-op for f32 inputs.
            s = s_ref[pl.ds(off, chunk), :].astype(jnp.float32)
            a = a_ref[pl.ds(off, chunk), :].astype(jnp.float32)
            ns = ns_ref[pl.ds(off, chunk), :].astype(jnp.float32)
            d = d_ref[:, pl.ds(off, chunk)].astype(jnp.float32)

            # Layer 1: per-feature-group partial dots summed + rank-1 done term.
            h1 = lax.dot_general(w1s, s, _TRANS_B,
                                 preferred_element_type=jnp.float32)
            h1 = h1 + lax.dot_general(w1a, a, _TRANS_B,
                                      preferred_element_type=jnp.float32)
            h1 = h1 + lax.dot_general(w1ns, ns, _TRANS_B,
                                      preferred_element_type=jnp.float32)
            h1 = h1 + w1d * d                       # (H1,1)*(1,chunk)
            h1 = jnp.maximum(h1 + b1, 0.0)          # (H1, chunk)

            # Layer 2.
            h2 = jnp.dot(w2, h1, preferred_element_type=jnp.float32) + b2
            h2 = jnp.maximum(h2, 0.0)               # (H2, chunk)

            # Layer 3 (out_size=1): lane-wise multiply + sublane (XLU) reduce
            # instead of an M=1 matmul; result is already a lane-dense row.
            out = jnp.sum(w3 * h2, axis=0, keepdims=True) + b3
            o_ref[:, pl.ds(off, chunk)] = out.astype(o_ref.dtype)

    return kernel


def _round_up(x, m):
    return ((x + m - 1) // m) * m


def _cdiv(a, b):
    return (a + b - 1) // b


def basic_reward_mlp_forward(state, action, next_state, done, params):
    """Forward pass of BasicRewardMLP (use_state=use_action=use_next_state=use_done=True)."""
    f32 = jnp.float32
    B = state.shape[0]

    # Pure metadata reshapes; the big inputs keep their native dtype (f32 or
    # bf16) so the wrapper adds no HBM materialization pass.  `done` is tiny,
    # so casting it here is free.
    s = state.reshape(B, -1)
    a = action.reshape(B, -1)
    ns = next_state.reshape(B, -1)
    d_row = done.reshape(1, -1).astype(f32)         # (1, B)

    ds_, da, dns = s.shape[1], a.shape[1], ns.shape[1]
    d_in = ds_ + da + dns + 1

    w1, b1, w2, b2, w3, b3 = params
    assert w1.shape[0] == d_in

    # One-time tiny-weight layout work (transpose + split W1 by feature group).
    w1t = w1.T.astype(f32)                          # (H1, D_in)
    w1t_s = w1t[:, :ds_]
    w1t_a = w1t[:, ds_:ds_ + da]
    w1t_ns = w1t[:, ds_ + da:ds_ + da + dns]
    w1t_d = w1t[:, d_in - 1:d_in]                   # (H1, 1)
    b1c = b1.reshape(-1, 1).astype(f32)             # (H1, 1)
    w2t = w2.T.astype(f32)                          # (H2, H1)
    b2c = b2.reshape(-1, 1).astype(f32)             # (H2, 1)
    w3c = w3.reshape(-1, 1).astype(f32)             # (H2, 1)
    b3c = b3.reshape(1, 1).astype(f32)              # (1, 1)
    H1, H2 = w1t.shape[0], w2t.shape[0]

    # Batch tile: multiple of 128 (batch sits on output lanes), large enough to
    # amortize the ~0.35us/grid-step overhead, capped so the double-buffered
    # lane-padded VMEM footprint stays ~12.5 MiB at TB=4096 (v7x-safe), and
    # chosen so mid-sized batches still give >=2 grid steps for v7x megacore.
    TB_MAX = 4096
    if B <= 128:
        TB = 128
    else:
        TB = min(TB_MAX, _round_up(_cdiv(B, 2), 128))

    # No jnp.pad: rely on Pallas's non-divisible-grid handling.  OOB input rows
    # only pollute output lanes that are sliced off below (per-sample compute
    # is lane-independent end-to-end).
    grid = (_cdiv(B, TB),)

    # In-kernel chunk width (divides TB, multiple of 128, capped at 512 so the
    # (32, chunk) f32 activations are <=16 vregs each).
    chunk = math.gcd(TB, 512)
    n_chunks = TB // chunk

    batch_rows = lambda i: (i, 0)     # batch on sublanes (input tiles)
    batch_lanes = lambda i: (0, i)    # batch on lanes (done row + output)
    resident = lambda i: (0, 0)       # weights: fetched once, stay in VMEM

    out = pl.pallas_call(
        _make_mlp_kernel(chunk, n_chunks),
        out_shape=jax.ShapeDtypeStruct((1, B), jnp.float32),
        grid=grid,
        in_specs=[
            pl.BlockSpec((TB, ds_), batch_rows),
            pl.BlockSpec((TB, da), batch_rows),
            pl.BlockSpec((TB, dns), batch_rows),
            pl.BlockSpec((1, TB), batch_lanes),
            pl.BlockSpec((H1, ds_), resident),
            pl.BlockSpec((H1, da), resident),
            pl.BlockSpec((H1, dns), resident),
            pl.BlockSpec((H1, 1), resident),
            pl.BlockSpec((H1, 1), resident),
            pl.BlockSpec((H2, H1), resident),
            pl.BlockSpec((H2, 1), resident),
            pl.BlockSpec((H2, 1), resident),
            pl.BlockSpec((1, 1), resident),
        ],
        out_specs=pl.BlockSpec((1, TB), batch_lanes),
        compiler_params=pltpu.CompilerParams(
            dimension_semantics=("parallel",),        # shard batch over v7x's 2 TCs
            vmem_limit_bytes=48 * 1024 * 1024,        # <=~48 MiB scoped on v7x; fine on v5e/v6e
        ),
    )(s, a, ns, d_row, w1t_s, w1t_a, w1t_ns, w1t_d, b1c, w2t, b2c, w3c, b3c)

    outputs = out[0, :B]              # squeeze_output=True; drops OOB lanes
    assert outputs.shape == state.shape[:1]
    return outputs


def init_params(key, d_in, hid_sizes=(32, 32)):
    """Deterministic synthetic parameter init (same shapes as nn.Linear layers)."""
    h1, h2 = hid_sizes
    ks = jax.random.split(key, 6)
    w1 = jax.random.normal(ks[0], (d_in, h1), jnp.float32) * 0.1
    b1 = jax.random.normal(ks[1], (1, h1), jnp.float32) * 0.1
    w2 = jax.random.normal(ks[2], (h1, h2), jnp.float32) * 0.1
    b2 = jax.random.normal(ks[3], (1, h2), jnp.float32) * 0.1
    w3 = jax.random.normal(ks[4], (h2, 1), jnp.float32) * 0.1
    b3 = jax.random.normal(ks[5], (1, 1), jnp.float32) * 0.1
    return (w1, b1, w2, b2, w3, b3)


def _reference_forward(state, action, next_state, done, params):
    """Pure-JAX reference for correctness check."""
    B = state.shape[0]
    x = jnp.concatenate(
        [state.reshape(B, -1), action.reshape(B, -1),
         next_state.reshape(B, -1), done.reshape(B, 1)],
        axis=1,
    ).astype(jnp.float32)
    w1, b1, w2, b2, w3, b3 = params
    h1 = jnp.maximum(x @ w1 + b1, 0.0)
    h2 = jnp.maximum(h1 @ w2 + b2, 0.0)
    return (h2 @ w3 + b3)[:, 0]


if __name__ == "__main__":
    key = jax.random.PRNGKey(0)
    k_state, k_action, k_next, k_done, k_params, k_extra = jax.random.split(key, 6)

    # Primary check: small shapes — batch=2, observation space (4, 4) ->
    # flattened obs dim 16, action dim 4, per-sample done flag.
    B = 2
    state = jax.random.normal(k_state, (B, 4, 4), jnp.float32)
    action = jax.random.normal(k_action, (B, 4), jnp.float32)
    next_state = jax.random.normal(k_next, (B, 4, 4), jnp.float32)
    done = (jax.random.uniform(k_done, (B,)) > 0.5).astype(jnp.float32)

    d_in = 16 + 4 + 16 + 1  # use_state + use_action + use_next_state + use_done
    params = init_params(k_params, d_in)

    out = basic_reward_mlp_forward(state, action, next_state, done, params)
    out = jax.block_until_ready(out)

    ref = _reference_forward(state, action, next_state, done, params)
    assert out.shape == (B,)
    assert jnp.allclose(out, ref, atol=1e-5, rtol=1e-5)

    # Secondary check: non-multiple-of-128 batch (exercises the pad-free,
    # non-divisible multi-step grid) with bf16 state/action/next_state
    # (exercises the halved-HBM-traffic input path).
    B2 = 300
    ks = jax.random.split(k_extra, 4)
    state2 = jax.random.normal(ks[0], (B2, 4, 4), jnp.float32).astype(jnp.bfloat16)
    action2 = jax.random.normal(ks[1], (B2, 4), jnp.float32).astype(jnp.bfloat16)
    next2 = jax.random.normal(ks[2], (B2, 4, 4), jnp.float32).astype(jnp.bfloat16)
    done2 = (jax.random.uniform(ks[3], (B2,)) > 0.5).astype(jnp.float32)

    out2 = basic_reward_mlp_forward(state2, action2, next2, done2, params)
    out2 = jax.block_until_ready(out2)
    ref2 = _reference_forward(state2.astype(jnp.float32), action2.astype(jnp.float32),
                              next2.astype(jnp.float32), done2, params)
    assert out2.shape == (B2,)
    assert jnp.allclose(out2, ref2, atol=1e-3, rtol=1e-3)

    print("KERNEL_OK")
</pallas_src>

<mosaic_0001>
module attributes {stable_mosaic.version = 11 : i64} {
  func.func @kernel(%arg0: i32, %arg1: memref<128x16xf32, #tpu.memory_space<vmem>>, %arg2: memref<128x4xf32, #tpu.memory_space<vmem>>, %arg3: memref<128x16xf32, #tpu.memory_space<vmem>>, %arg4: memref<1x128xf32, #tpu.memory_space<vmem>>, %arg5: memref<32x16xf32, #tpu.memory_space<vmem>>, %arg6: memref<32x4xf32, #tpu.memory_space<vmem>>, %arg7: memref<32x16xf32, #tpu.memory_space<vmem>>, %arg8: memref<32x1xf32, #tpu.memory_space<vmem>>, %arg9: memref<32x1xf32, #tpu.memory_space<vmem>>, %arg10: memref<32x32xf32, #tpu.memory_space<vmem>>, %arg11: memref<32x1xf32, #tpu.memory_space<vmem>>, %arg12: memref<32x1xf32, #tpu.memory_space<vmem>>, %arg13: memref<1x1xf32, #tpu.memory_space<vmem>>, %arg14: memref<1x128xf32, #tpu.memory_space<vmem>>) attributes {dimension_semantics = [#tpu.dimension_semantics<parallel>], iteration_bounds = array<i64: 1>, scalar_prefetch = 0 : i64, scratch_operands = 0 : i64, tpu.core_type = #tpu.core_type<tc>, window_params = [{transform_indices = @transform_0, window_bounds = array<i64: 128, 16>}, {transform_indices = @transform_1, window_bounds = array<i64: 128, 4>}, {transform_indices = @transform_2, window_bounds = array<i64: 128, 16>}, {transform_indices = @transform_3, window_bounds = array<i64: 1, 128>}, {pipeline_mode = #tpu.pipeline_mode<synchronous>, transform_indices = @transform_4, window_bounds = array<i64: 32, 16>}, {pipeline_mode = #tpu.pipeline_mode<synchronous>, transform_indices = @transform_5, window_bounds = array<i64: 32, 4>}, {pipeline_mode = #tpu.pipeline_mode<synchronous>, transform_indices = @transform_6, window_bounds = array<i64: 32, 16>}, {pipeline_mode = #tpu.pipeline_mode<synchronous>, transform_indices = @transform_7, window_bounds = array<i64: 32, 1>}, {pipeline_mode = #tpu.pipeline_mode<synchronous>, transform_indices = @transform_8, window_bounds = array<i64: 32, 1>}, {pipeline_mode = #tpu.pipeline_mode<synchronous>, transform_indices = @transform_9, window_bounds = array<i64: 32, 32>}, {pipeline_mode = #tpu.pipeline_mode<synchronous>, transform_indices = @transform_10, window_bounds = array<i64: 32, 1>}, {pipeline_mode = #tpu.pipeline_mode<synchronous>, transform_indices = @transform_11, window_bounds = array<i64: 32, 1>}, {pipeline_mode = #tpu.pipeline_mode<synchronous>, transform_indices = @transform_12, window_bounds = array<i64: 1, 1>}, {transform_indices = @transform_13, window_bounds = array<i64: 1, 128>}]} {
    %c0 = arith.constant 0 : index
    %c0_0 = arith.constant 0 : index
    %0 = vector.load %arg5[%c0, %c0_0] : memref<32x16xf32, #tpu.memory_space<vmem>>, vector<32x16xf32>
    %c0_1 = arith.constant 0 : index
    %c0_2 = arith.constant 0 : index
    %1 = vector.load %arg6[%c0_1, %c0_2] : memref<32x4xf32, #tpu.memory_space<vmem>>, vector<32x4xf32>
    %c0_3 = arith.constant 0 : index
    %c0_4 = arith.constant 0 : index
    %2 = vector.load %arg7[%c0_3, %c0_4] : memref<32x16xf32, #tpu.memory_space<vmem>>, vector<32x16xf32>
    %c0_5 = arith.constant 0 : index
    %c0_6 = arith.constant 0 : index
    %3 = vector.load %arg8[%c0_5, %c0_6] : memref<32x1xf32, #tpu.memory_space<vmem>>, vector<32x1xf32>
    %c0_7 = arith.constant 0 : index
    %c0_8 = arith.constant 0 : index
    %4 = vector.load %arg9[%c0_7, %c0_8] : memref<32x1xf32, #tpu.memory_space<vmem>>, vector<32x1xf32>
    %c0_9 = arith.constant 0 : index
    %c0_10 = arith.constant 0 : index
    %5 = vector.load %arg10[%c0_9, %c0_10] : memref<32x32xf32, #tpu.memory_space<vmem>>, vector<32x32xf32>
    %c0_11 = arith.constant 0 : index
    %c0_12 = arith.constant 0 : index
    %6 = vector.load %arg11[%c0_11, %c0_12] : memref<32x1xf32, #tpu.memory_space<vmem>>, vector<32x1xf32>
    %c0_13 = arith.constant 0 : index
    %c0_14 = arith.constant 0 : index
    %7 = vector.load %arg12[%c0_13, %c0_14] : memref<32x1xf32, #tpu.memory_space<vmem>>, vector<32x1xf32>
    %c0_15 = arith.constant 0 : index
    %c0_16 = arith.constant 0 : index
    %8 = vector.load %arg13[%c0_15, %c0_16] : memref<1x1xf32, #tpu.memory_space<vmem>>, vector<1x1xf32>
    %c0_17 = arith.constant 0 : index
    %c0_18 = arith.constant 0 : index
    %9 = vector.load %arg1[%c0_17, %c0_18] : memref<128x16xf32, #tpu.memory_space<vmem>>, vector<128x16xf32>
    %c0_19 = arith.constant 0 : index
    %c0_20 = arith.constant 0 : index
    %10 = vector.load %arg2[%c0_19, %c0_20] : memref<128x4xf32, #tpu.memory_space<vmem>>, vector<128x4xf32>
    %c0_21 = arith.constant 0 : index
    %c0_22 = arith.constant 0 : index
    %11 = vector.load %arg3[%c0_21, %c0_22] : memref<128x16xf32, #tpu.memory_space<vmem>>, vector<128x16xf32>
    %c0_23 = arith.constant 0 : index
    %c0_24 = arith.constant 0 : index
    %12 = vector.load %arg4[%c0_23, %c0_24] : memref<1x128xf32, #tpu.memory_space<vmem>>, vector<1x128xf32>
    %cst = arith.constant dense<0.000000e+00> : vector<32x128xf32>
    %13 = tpu.matmul %0, %9, %cst {dimension_numbers = #tpu.dot_dimension_numbers<[1], [1], [0], [0], [0, 0, 1, 0], [], []>} : vector<32x16xf32>, vector<128x16xf32>, vector<32x128xf32> -> vector<32x128xf32>
    %cst_25 = arith.constant dense<0.000000e+00> : vector<32x128xf32>
    %14 = tpu.matmul %1, %10, %cst_25 {dimension_numbers = #tpu.dot_dimension_numbers<[1], [1], [0], [0], [0, 0, 1, 0], [], []>} : vector<32x4xf32>, vector<128x4xf32>, vector<32x128xf32> -> vector<32x128xf32>
    %15 = arith.addf %13, %14 : vector<32x128xf32>
    %cst_26 = arith.constant dense<0.000000e+00> : vector<32x128xf32>
    %16 = tpu.matmul %2, %11, %cst_26 {dimension_numbers = #tpu.dot_dimension_numbers<[1], [1], [0], [0], [0, 0, 1, 0], [], []>} : vector<32x16xf32>, vector<128x16xf32>, vector<32x128xf32> -> vector<32x128xf32>
    %17 = arith.addf %15, %16 : vector<32x128xf32>
    %18 = vector.broadcast %3 : vector<32x1xf32> to vector<32x128xf32>
    %19 = vector.broadcast %12 : vector<1x128xf32> to vector<32x128xf32>
    %20 = arith.mulf %18, %19 : vector<32x128xf32>
    %21 = arith.addf %17, %20 : vector<32x128xf32>
    %22 = vector.broadcast %4 : vector<32x1xf32> to vector<32x128xf32>
    %23 = arith.addf %21, %22 : vector<32x128xf32>
    %cst_27 = arith.constant 0.000000e+00 : f32
    %24 = vector.broadcast %cst_27 : f32 to vector<32x128xf32>
    %25 = arith.maximumf %23, %24 : vector<32x128xf32>
    %cst_28 = arith.constant dense<0.000000e+00> : vector<32x128xf32>
    %26 = tpu.matmul %5, %25, %cst_28 {dimension_numbers = #tpu.dot_dimension_numbers<[1], [0], [0], [1], [0, 0, 1, 1], [], []>} : vector<32x32xf32>, vector<32x128xf32>, vector<32x128xf32> -> vector<32x128xf32>
    %27 = vector.broadcast %6 : vector<32x1xf32> to vector<32x128xf32>
    %28 = arith.addf %26, %27 : vector<32x128xf32>
    %cst_29 = arith.constant 0.000000e+00 : f32
    %29 = vector.broadcast %cst_29 : f32 to vector<32x128xf32>
    %30 = arith.maximumf %28, %29 : vector<32x128xf32>
    %31 = vector.broadcast %7 : vector<32x1xf32> to vector<32x128xf32>
    %32 = arith.mulf %31, %30 : vector<32x128xf32>
    %cst_30 = arith.constant dense<0.000000e+00> : vector<128xf32>
    %33 = vector.multi_reduction <add>, %32, %cst_30 [0] : vector<32x128xf32> to vector<128xf32>
    %34 = vector.shape_cast %33 : vector<128xf32> to vector<1x128xf32>
    %35 = vector.broadcast %8 : vector<1x1xf32> to vector<1x128xf32>
    %36 = arith.addf %34, %35 : vector<1x128xf32>
    %c0_31 = arith.constant 0 : index
    %c0_32 = arith.constant 0 : index
    %37 = vector.load %arg14[%c0_31, %c0_32] : memref<1x128xf32, #tpu.memory_space<vmem>>, vector<1x128xf32>
    tpu.vector_store %arg14[%c0_31, %c0_32], %36 {strides = array<i32>} : memref<1x128xf32, #tpu.memory_space<vmem>>, vector<1x128xf32>,
    return
  }
  func.func @transform_0(%arg0: i32) -> (i32, i32) {
    %c0_i32 = arith.constant 0 : i32
    %c0_i32_0 = arith.constant 0 : i32
    return %arg0, %c0_i32 : i32, i32
  }
  func.func @transform_1(%arg0: i32) -> (i32, i32) {
    %c0_i32 = arith.constant 0 : i32
    %c0_i32_0 = arith.constant 0 : i32
    return %arg0, %c0_i32 : i32, i32
  }
  func.func @transform_2(%arg0: i32) -> (i32, i32) {
    %c0_i32 = arith.constant 0 : i32
    %c0_i32_0 = arith.constant 0 : i32
    return %arg0, %c0_i32 : i32, i32
  }
  func.func @transform_3(%arg0: i32) -> (i32, i32) {
    %c0_i32 = arith.constant 0 : i32
    %c0_i32_0 = arith.constant 0 : i32
    return %c0_i32, %arg0 : i32, i32
  }
  func.func @transform_4(%arg0: i32) -> (i32, i32) {
    %c0_i32 = arith.constant 0 : i32
    %c0_i32_0 = arith.constant 0 : i32
    %c0_i32_1 = arith.constant 0 : i32
    return %c0_i32, %c0_i32_0 : i32, i32
  }
  func.func @transform_5(%arg0: i32) -> (i32, i32) {
    %c0_i32 = arith.constant 0 : i32
    %c0_i32_0 = arith.constant 0 : i32
    %c0_i32_1 = arith.constant 0 : i32
    return %c0_i32, %c0_i32_0 : i32, i32
  }
  func.func @transform_6(%arg0: i32) -> (i32, i32) {
    %c0_i32 = arith.constant 0 : i32
    %c0_i32_0 = arith.constant 0 : i32
    %c0_i32_1 = arith.constant 0 : i32
    return %c0_i32, %c0_i32_0 : i32, i32
  }
  func.func @transform_7(%arg0: i32) -> (i32, i32) {
    %c0_i32 = arith.constant 0 : i32
    %c0_i32_0 = arith.constant 0 : i32
    %c0_i32_1 = arith.constant 0 : i32
    return %c0_i32, %c0_i32_0 : i32, i32
  }
  func.func @transform_8(%arg0: i32) -> (i32, i32) {
    %c0_i32 = arith.constant 0 : i32
    %c0_i32_0 = arith.constant 0 : i32
    %c0_i32_1 = arith.constant 0 : i32
    return %c0_i32, %c0_i32_0 : i32, i32
  }
  func.func @transform_9(%arg0: i32) -> (i32, i32) {
    %c0_i32 = arith.constant 0 : i32
    %c0_i32_0 = arith.constant 0 : i32
    %c0_i32_1 = arith.constant 0 : i32
    return %c0_i32, %c0_i32_0 : i32, i32
  }
  func.func @transform_10(%arg0: i32) -> (i32, i32) {
    %c0_i32 = arith.constant 0 : i32
    %c0_i32_0 = arith.constant 0 : i32
    %c0_i32_1 = arith.constant 0 : i32
    return %c0_i32, %c0_i32_0 : i32, i32
  }
  func.func @transform_11(%arg0: i32) -> (i32, i32) {
    %c0_i32 = arith.constant 0 : i32
    %c0_i32_0 = arith.constant 0 : i32
    %c0_i32_1 = arith.constant 0 : i32
    return %c0_i32, %c0_i32_0 : i32, i32
  }
  func.func @transform_12(%arg0: i32) -> (i32, i32) {
    %c0_i32 = arith.constant 0 : i32
    %c0_i32_0 = arith.constant 0 : i32
    %c0_i32_1 = arith.constant 0 : i32
    return %c0_i32, %c0_i32_0 : i32, i32
  }
  func.func @transform_13(%arg0: i32) -> (i32, i32) {
    %c0_i32 = arith.constant 0 : i32
    %c0_i32_0 = arith.constant 0 : i32
    return %c0_i32, %arg0 : i32, i32
  }
}

</mosaic_0001>

<llo_original>
// kernel: tpu_custom_call.1
$region0: #{tpu_custom_call.1}
  #allocation0 [shape = 'u32[]', space=smem, size = 0x4, offset = 0x4, fixed_abs, tag = 'smem constant byte address 0x4 - core index']
  #allocation1 [shape = 'u32[144,128]{1,0:T(1,128)}', space=vmem, size = 0x12000, scoped, tag = 'internal scratch']
  #allocation2 [shape = 'f32[1,1]{1,0:T(1,128)S(1)}', space=vmem, size = 0x200, scoped, tag = 'scoped memory for tpu_custom_call.1']
  %s0 = inlined_call_operand.vmem [shape: f32[2,16], index: 0, kind: input, shape index: {}]
  %s1 = inlined_call_operand.vmem [shape: f32[2,4], index: 1, kind: input, shape index: {}]
  %s2 = inlined_call_operand.vmem [shape: f32[2,16], index: 2, kind: input, shape index: {}]
  %s3 = inlined_call_operand.vmem [shape: f32[1,2], index: 3, kind: input, shape index: {}]
  %s4 = inlined_call_operand.vmem [shape: f32[32,16], index: 4, kind: input, shape index: {}]
  %s5 = inlined_call_operand.vmem [shape: f32[32,4], index: 5, kind: input, shape index: {}]
  %s6 = inlined_call_operand.vmem [shape: f32[32,16], index: 6, kind: input, shape index: {}]
  %s7 = inlined_call_operand.vmem [shape: f32[32,1], index: 7, kind: input, shape index: {}]
  %s8 = inlined_call_operand.vmem [shape: f32[32,1], index: 8, kind: input, shape index: {}]
  %s9 = inlined_call_operand.vmem [shape: f32[32,32], index: 9, kind: input, shape index: {}]
  %s10 = inlined_call_operand.vmem [shape: f32[32,1], index: 10, kind: input, shape index: {}]
  %s11 = inlined_call_operand.vmem [shape: f32[32,1], index: 11, kind: input, shape index: {}]
  %s12 = inlined_call_operand.<no memory space> [shape: f32[1,1], index: 12, kind: input, shape index: {}]
  %s13 = inlined_call_operand.hbm [shape: f32[1,2], index: 13, kind: output, shape index: {}]
  %s14 = sld [smem:[#allocation0]]
  $region62: #{tpu_custom_call.1} parent=0
    _
  %s16 = ssub.s32 1, %s14
  %s17 = scalar_select 0, %s16, %s14
  %v18 = vstv %s12
  %19 = vst [vmem:[#allocation2] sm:$0x1] %v18
  $region1: #{tpu_custom_call.1} parent=0
    #allocation3 [shape = 'u8[512]{0}', space=vmem, size = 0x400, scoped, tag = 'output window, operand 0, single buffered']
    #allocation4 [shape = 's32[1]{0}', space=sflag, size = 0x4, scoped, tag = 'scoped memory for tpu_custom_call.1']
    %20 = vsyncpa [#allocation4], 0
    // Predicated region
    $region2: #{tpu_custom_call.1} parent=1 // pred_check
      _
    $region3: #{tpu_custom_call.1} parent=1 // pred_check_branch
      %22 = sbr.rel (0) target = $region5
    $region4: #{tpu_custom_call.1} parent=1 // pred_region
      _
    $region5: #{tpu_custom_call.1} parent=1 // pred_fallthru
      _
    // Predicated region
    $region6: #{tpu_custom_call.1} parent=1 // pred_check
      _
    $region7: #{tpu_custom_call.1} parent=1 // pred_check_branch
      %24 = sbr.rel (0) target = $region9
    $region8: #{tpu_custom_call.1} parent=1 // pred_region
      _
    $region9: #{tpu_custom_call.1} parent=1 // pred_fallthru
      _
    // Predicated region
    $region10: #{tpu_custom_call.1} parent=1 // pred_check
      _
    $region11: #{tpu_custom_call.1} parent=1 // pred_check_branch
      %26 = sbr.rel (0) target = $region13
    $region12: #{tpu_custom_call.1} parent=1 // pred_region
      _
    $region13: #{tpu_custom_call.1} parent=1 // pred_fallthru
      _
    // Predicated region
    $region14: #{tpu_custom_call.1} parent=1 // pred_check
      _
    $region15: #{tpu_custom_call.1} parent=1 // pred_check_branch
      %28 = sbr.rel (0) target = $region17
    $region16: #{tpu_custom_call.1} parent=1 // pred_region
      _
    $region17: #{tpu_custom_call.1} parent=1 // pred_fallthru
      _
    // Predicated region
    $region18: #{tpu_custom_call.1} parent=1 // pred_check
      _
    $region19: #{tpu_custom_call.1} parent=1 // pred_check_branch
      %30 = sbr.rel (0) target = $region21
    $region20: #{tpu_custom_call.1} parent=1 // pred_region
      _
    $region21: #{tpu_custom_call.1} parent=1 // pred_fallthru
      _
    // Predicated region
    $region22: #{tpu_custom_call.1} parent=1 // pred_check
      _
    $region23: #{tpu_custom_call.1} parent=1 // pred_check_branch
      %32 = sbr.rel (0) target = $region25
    $region24: #{tpu_custom_call.1} parent=1 // pred_region
      _
    $region25: #{tpu_custom_call.1} parent=1 // pred_fallthru
      _
    // Predicated region
    $region26: #{tpu_custom_call.1} parent=1 // pred_check
      _
    $region27: #{tpu_custom_call.1} parent=1 // pred_check_branch
      %34 = sbr.rel (0) target = $region29
    $region28: #{tpu_custom_call.1} parent=1 // pred_region
      _
    $region29: #{tpu_custom_call.1} parent=1 // pred_fallthru
      _
    // Predicated region
    $region30: #{tpu_custom_call.1} parent=1 // pred_check
      _
    $region31: #{tpu_custom_call.1} parent=1 // pred_check_branch
      %36 = sbr.rel (0) target = $region33
    $region32: #{tpu_custom_call.1} parent=1 // pred_region
      _
    $region33: #{tpu_custom_call.1} parent=1 // pred_fallthru
      _
    // Predicated region
    $region34: #{tpu_custom_call.1} parent=1 // pred_check
      _
    $region35: #{tpu_custom_call.1} parent=1 // pred_check_branch
      %38 = sbr.rel (0) target = $region37
    $region36: #{tpu_custom_call.1} parent=1 // pred_region
      _
    $region37: #{tpu_custom_call.1} parent=1 // pred_fallthru
      _
    // Predicated region
    $region38: #{tpu_custom_call.1} parent=1 // pred_check
      _
    $region39: #{tpu_custom_call.1} parent=1 // pred_check_branch
      %40 = sbr.rel (0) target = $region41
    $region40: #{tpu_custom_call.1} parent=1 // pred_region
      _
    $region41: #{tpu_custom_call.1} parent=1 // pred_fallthru
      _
    // Predicated region
    $region42: #{tpu_custom_call.1} parent=1 // pred_check
      _
    $region43: #{tpu_custom_call.1} parent=1 // pred_check_branch
      %42 = sbr.rel (0) target = $region45
    $region44: #{tpu_custom_call.1} parent=1 // pred_region
      _
    $region45: #{tpu_custom_call.1} parent=1 // pred_fallthru
      _
    // Predicated region
    $region46: #{tpu_custom_call.1} parent=1 // pred_check
      _
    $region47: #{tpu_custom_call.1} parent=1 // pred_check_branch
      %44 = sbr.rel (0) target = $region49
    $region48: #{tpu_custom_call.1} parent=1 // pred_region
      _
    $region49: #{tpu_custom_call.1} parent=1 // pred_fallthru
      _
    // Predicated region
    $region50: #{tpu_custom_call.1} parent=1 // pred_check
      _
    $region51: #{tpu_custom_call.1} parent=1 // pred_check_branch
      %46 = sbr.rel (0) target = $region53
    $region52: #{tpu_custom_call.1} parent=1 // pred_region
      _
    $region53: #{tpu_custom_call.1} parent=1 // pred_fallthru
      _
    %v47 = vld [vmem:[%s4] sm:$0xff]
    %v48 = vld [vmem:[%s4 + $0x8] sm:$0xff]
    %v49 = vld [vmem:[%s4 + $0x10] sm:$0xff]
    %v50 = vld [vmem:[%s4 + $0x18] sm:$0xff]
    %v51 = vld [vmem:[%s5] sm:$0xff]
    %v52 = vld [vmem:[%s5 + $0x8] sm:$0xff]
    %v53 = vld [vmem:[%s5 + $0x10] sm:$0xff]
    %v54 = vld [vmem:[%s5 + $0x18] sm:$0xff]
    %v55 = vld [vmem:[%s6] sm:$0xff]
    %v56 = vld [vmem:[%s6 + $0x8] sm:$0xff]
    %v57 = vld [vmem:[%s6 + $0x10] sm:$0xff]
    %v58 = vld [vmem:[%s6 + $0x18] sm:$0xff]
    %v59 = vld [vmem:[%s7] sm:$0xff]
    %v60 = vld [vmem:[%s7 + $0x8] sm:$0xff]
    %v61 = vld [vmem:[%s7 + $0x10] sm:$0xff]
    %v62 = vld [vmem:[%s7 + $0x18] sm:$0xff]
    %v63 = vld [vmem:[%s8] sm:$0xff]
    %v64 = vld [vmem:[%s8 + $0x8] sm:$0xff]
    %v65 = vld [vmem:[%s8 + $0x10] sm:$0xff]
    %v66 = vld [vmem:[%s8 + $0x18] sm:$0xff]
    %v67 = vld [vmem:[%s9] sm:$0xff]
    %v68 = vld [vmem:[%s9 + $0x8] sm:$0xff]
    %v69 = vld [vmem:[%s9 + $0x10] sm:$0xff]
    %v70 = vld [vmem:[%s9 + $0x18] sm:$0xff]
    %v71 = vld [vmem:[%s10] sm:$0xff]
    %v72 = vld [vmem:[%s10 + $0x8] sm:$0xff]
    %v73 = vld [vmem:[%s10 + $0x10] sm:$0xff]
    %v74 = vld [vmem:[%s10 + $0x18] sm:$0xff]
    %v75 = vld [vmem:[%s11] sm:$0xff]
    %v76 = vld [vmem:[%s11 + $0x8] sm:$0xff]
    %v77 = vld [vmem:[%s11 + $0x10] sm:$0xff]
    %v78 = vld [vmem:[%s11 + $0x18] sm:$0xff]
    %v79 = vld [vmem:[#allocation2] sm:$0x1]
    %v80 = vld [vmem:[%s0] sm:$0xff]
    %v81 = vld [vmem:[%s0 + $0x8] sm:$0xff]
    %v82 = vld [vmem:[%s0 + $0x10] sm:$0xff]
    %v83 = vld [vmem:[%s0 + $0x18] sm:$0xff]
    %v84 = vld [vmem:[%s0 + $0x20] sm:$0xff]
    %v85 = vld [vmem:[%s0 + $0x28] sm:$0xff]
    %v86 = vld [vmem:[%s0 + $0x30] sm:$0xff]
    %v87 = vld [vmem:[%s0 + $0x38] sm:$0xff]
    %v88 = vld [vmem:[%s0 + $0x40] sm:$0xff]
    %v89 = vld [vmem:[%s0 + $0x48] sm:$0xff]
    %v90 = vld [vmem:[%s0 + $0x50] sm:$0xff]
    %v91 = vld [vmem:[%s0 + $0x58] sm:$0xff]
    %v92 = vld [vmem:[%s0 + $0x60] sm:$0xff]
    %v93 = vld [vmem:[%s0 + $0x68] sm:$0xff]
    %v94 = vld [vmem:[%s0 + $0x70] sm:$0xff]
    %v95 = vld [vmem:[%s0 + $0x78] sm:$0xff]
    %v96 = vld [vmem:[%s1] sm:$0xff]
    %v97 = vld [vmem:[%s1 + $0x8] sm:$0xff]
    %v98 = vld [vmem:[%s1 + $0x10] sm:$0xff]
    %v99 = vld [vmem:[%s1 + $0x18] sm:$0xff]
    %v100 = vld [vmem:[%s1 + $0x20] sm:$0xff]
    %v101 = vld [vmem:[%s1 + $0x28] sm:$0xff]
    %v102 = vld [vmem:[%s1 + $0x30] sm:$0xff]
    %v103 = vld [vmem:[%s1 + $0x38] sm:$0xff]
    %v104 = vld [vmem:[%s1 + $0x40] sm:$0xff]
    %v105 = vld [vmem:[%s1 + $0x48] sm:$0xff]
    %v106 = vld [vmem:[%s1 + $0x50] sm:$0xff]
    %v107 = vld [vmem:[%s1 + $0x58] sm:$0xff]
    %v108 = vld [vmem:[%s1 + $0x60] sm:$0xff]
    %v109 = vld [vmem:[%s1 + $0x68] sm:$0xff]
    %v110 = vld [vmem:[%s1 + $0x70] sm:$0xff]
    %v111 = vld [vmem:[%s1 + $0x78] sm:$0xff]
    %v112 = vld [vmem:[%s2] sm:$0xff]
    %v113 = vld [vmem:[%s2 + $0x8] sm:$0xff]
    %v114 = vld [vmem:[%s2 + $0x10] sm:$0xff]
    %v115 = vld [vmem:[%s2 + $0x18] sm:$0xff]
    %v116 = vld [vmem:[%s2 + $0x20] sm:$0xff]
    %v117 = vld [vmem:[%s2 + $0x28] sm:$0xff]
    %v118 = vld [vmem:[%s2 + $0x30] sm:$0xff]
    %v119 = vld [vmem:[%s2 + $0x38] sm:$0xff]
    %v120 = vld [vmem:[%s2 + $0x40] sm:$0xff]
    %v121 = vld [vmem:[%s2 + $0x48] sm:$0xff]
    %v122 = vld [vmem:[%s2 + $0x50] sm:$0xff]
    %v123 = vld [vmem:[%s2 + $0x58] sm:$0xff]
    %v124 = vld [vmem:[%s2 + $0x60] sm:$0xff]
    %v125 = vld [vmem:[%s2 + $0x68] sm:$0xff]
    %v126 = vld [vmem:[%s2 + $0x70] sm:$0xff]
    %v127 = vld [vmem:[%s2 + $0x78] sm:$0xff]
    %v128 = vld [vmem:[%s3] sm:$0x1]
    %vm129 = vcmask 31744
    %v131 = vsel %vm129, %v51, 0
    %v134 = vsel %vm129, %v52, 0
    %v137 = vsel %vm129, %v53, 0
    %v140 = vsel %vm129, %v54, 0
    %v143 = vsel %vm129, %v96, 0
    %v146 = vsel %vm129, %v97, 0
    %v149 = vsel %vm129, %v98, 0
    %v152 = vsel %vm129, %v99, 0
    %v155 = vsel %vm129, %v100, 0
    %v158 = vsel %vm129, %v101, 0
    %v161 = vsel %vm129, %v102, 0
    %v164 = vsel %vm129, %v103, 0
    %v167 = vsel %vm129, %v104, 0
    %v170 = vsel %vm129, %v105, 0
    %v173 = vsel %vm129, %v106, 0
    %v176 = vsel %vm129, %v107, 0
    %v179 = vsel %vm129, %v108, 0
    %v182 = vsel %vm129, %v109, 0
    %v185 = vsel %vm129, %v110, 0
    %v188 = vsel %vm129, %v111, 0
    %190 = vmatprep.subr.mxu0 0.0
    %191 = vmatpush1.xpose.msra.mxu0 %v143
    %192 = vmatprep.subr.mxu0 0.0
    %193 = vmatpush1.xpose.msra.mxu0 %v146
    %194 = vmatprep.subr.mxu0 0.0
    %195 = vmatpush1.xpose.msra.mxu0 %v149
    %196 = vmatprep.subr.mxu0 0.0
    %197 = vmatpush1.xpose.msra.mxu0 %v152
    %198 = vmatprep.subr.mxu0 0.0
    %199 = vmatpush1.xpose.msra.mxu0 %v155
    %200 = vmatprep.subr.mxu0 0.0
    %201 = vmatpush1.xpose.msra.mxu0 %v158
    %202 = vmatprep.subr.mxu0 0.0
    %203 = vmatpush1.xpose.msra.mxu0 %v161
    %204 = vmatprep.subr.mxu0 0.0
    %205 = vmatpush1.xpose.msra.mxu0 %v164
    %206 = vmatprep.subr.mxu0 0.0
    %207 = vmatpush1.xpose.msra.mxu0 %v167
    %208 = vmatprep.subr.mxu0 0.0
    %209 = vmatpush1.xpose.msra.mxu0 %v170
    %210 = vmatprep.subr.mxu0 0.0
    %211 = vmatpush1.xpose.msra.mxu0 %v173
    %212 = vmatprep.subr.mxu0 0.0
    %213 = vmatpush1.xpose.msra.mxu0 %v176
    %214 = vmatprep.subr.mxu0 0.0
    %215 = vmatpush1.xpose.msra.mxu0 %v179
    %216 = vmatprep.subr.mxu0 0.0
    %217 = vmatpush1.xpose.msra.mxu0 %v182
    %218 = vmatprep.subr.mxu0 0.0
    %219 = vmatpush1.xpose.msra.mxu0 %v185
    %220 = vmatprep.subr.mxu0 0.0
    %221 = vmatpush1.xpose.msra.mxu0 %v188
    %222 = vmatprep.subr.mxu0 0.0
    %223 = vmatpush1.xpose.msra.mxu0 0.0
    %224 = vmatprep.subr.mxu0 0.0
    %225 = vmatpush1.xpose.msra.mxu0 0.0
    %226 = vmatprep.subr.mxu0 0.0
    %227 = vmatpush1.xpose.msra.mxu0 0.0
    %228 = vmatprep.subr.mxu0 0.0
    %229 = vmatpush1.xpose.msra.mxu0 0.0
    %230 = vmatprep.subr.mxu0 0.0
    %231 = vmatpush1.xpose.msra.mxu0 0.0
    %232 = vmatprep.subr.mxu0 0.0
    %233 = vmatpush1.xpose.msra.mxu0 0.0
    %234 = vmatprep.subr.mxu0 0.0
    %235 = vmatpush1.xpose.msra.mxu0 0.0
    %236 = vmatprep.subr.mxu0 0.0
    %237 = vmatpush1.xpose.msra.mxu0 0.0
    %238 = vmatprep.subr.mxu0 0.0
    %239 = vmatpush1.xpose.msra.mxu0 0.0
    %240 = vmatprep.subr.mxu0 0.0
    %241 = vmatpush1.xpose.msra.mxu0 0.0
    %242 = vmatprep.subr.mxu0 0.0
    %243 = vmatpush1.xpose.msra.mxu0 0.0
    %244 = vmatprep.subr.mxu0 0.0
    %245 = vmatpush1.xpose.msra.mxu0 0.0
    %246 = vmatprep.subr.mxu0 0.0
    %247 = vmatpush1.xpose.msra.mxu0 0.0
    %248 = vmatprep.subr.mxu0 0.0
    %249 = vmatpush1.xpose.msra.mxu0 0.0
    %250 = vmatprep.subr.mxu0 0.0
    %251 = vmatpush1.xpose.msra.mxu0 0.0
    %252 = vmatprep.subr.mxu0 0.0
    %253 = vmatpush1.xpose.msra.mxu0 0.0
    %254 = vmatprep.mubr.f32.mxu0 0.0
    %255 = vmatmul.mubr.f32.gmra.mrb[0].mxu0 %v131
    %v256 = vpop.f32.mrb[0].mxu0
    %v257 = vadd.f32 0.0, %v256
    %v258 = vpop.f32.mrb[0].mxu0
    %259 = vmatprep.mubr.f32.mxu0 0.0
    %260 = vmatmul.mubr.f32.gmra.mrb[0].mxu0 %v134
    %v261 = vpop.f32.mrb[0].mxu0
    %v262 = vadd.f32 0.0, %v261
    %v263 = vpop.f32.mrb[0].mxu0
    %264 = vmatprep.mubr.f32.mxu0 0.0
    %265 = vmatmul.mubr.f32.gmra.mrb[0].mxu0 %v137
    %v266 = vpop.f32.mrb[0].mxu0
    %v267 = vadd.f32 0.0, %v266
    %v268 = vpop.f32.mrb[0].mxu0
    %269 = vmatprep.mubr.f32.mxu0 0.0
    %270 = vmatmul.mubr.f32.gmra.mrb[0].mxu0 %v140
    %v271 = vpop.f32.mrb[0].mxu0
    %v272 = vadd.f32 0.0, %v271
    %v273 = vpop.f32.mrb[0].mxu0
    %274 = vdwg.mxu0
    %vm275 = vcmask 130048
    %v277 = vsel %vm275, %v47, 0
    %v280 = vsel %vm275, %v48, 0
    %v283 = vsel %vm275, %v49, 0
    %v286 = vsel %vm275, %v50, 0
    %v289 = vsel %vm275, %v80, 0
    %v292 = vsel %vm275, %v81, 0
    %v295 = vsel %vm275, %v82, 0
    %v298 = vsel %vm275, %v83, 0
    %v301 = vsel %vm275, %v84, 0
    %v304 = vsel %vm275, %v85, 0
    %v307 = vsel %vm275, %v86, 0
    %v310 = vsel %vm275, %v87, 0
    %v313 = vsel %vm275, %v88, 0
    %v316 = vsel %vm275, %v89, 0
    %v319 = vsel %vm275, %v90, 0
    %v322 = vsel %vm275, %v91, 0
    %v325 = vsel %vm275, %v92, 0
    %v328 = vsel %vm275, %v93, 0
    %v331 = vsel %vm275, %v94, 0
    %v334 = vsel %vm275, %v95, 0
    %336 = vmatprep.subr.mxu0 0.0
    %337 = vmatpush1.xpose.msra.mxu0 %v289
    %338 = vmatprep.subr.mxu0 0.0
    %339 = vmatpush1.xpose.msra.mxu0 %v292
    %340 = vmatprep.subr.mxu0 0.0
    %341 = vmatpush1.xpose.msra.mxu0 %v295
    %342 = vmatprep.subr.mxu0 0.0
    %343 = vmatpush1.xpose.msra.mxu0 %v298
    %344 = vmatprep.subr.mxu0 0.0
    %345 = vmatpush1.xpose.msra.mxu0 %v301
    %346 = vmatprep.subr.mxu0 0.0
    %347 = vmatpush1.xpose.msra.mxu0 %v304
    %348 = vmatprep.subr.mxu0 0.0
    %349 = vmatpush1.xpose.msra.mxu0 %v307
    %350 = vmatprep.subr.mxu0 0.0
    %351 = vmatpush1.xpose.msra.mxu0 %v310
    %352 = vmatprep.subr.mxu0 0.0
    %353 = vmatpush1.xpose.msra.mxu0 %v313
    %354 = vmatprep.subr.mxu0 0.0
    %355 = vmatpush1.xpose.msra.mxu0 %v316
    %356 = vmatprep.subr.mxu0 0.0
    %357 = vmatpush1.xpose.msra.mxu0 %v319
    %358 = vmatprep.subr.mxu0 0.0
    %359 = vmatpush1.xpose.msra.mxu0 %v322
    %360 = vmatprep.subr.mxu0 0.0
    %361 = vmatpush1.xpose.msra.mxu0 %v325
    %362 = vmatprep.subr.mxu0 0.0
    %363 = vmatpush1.xpose.msra.mxu0 %v328
    %364 = vmatprep.subr.mxu0 0.0
    %365 = vmatpush1.xpose.msra.mxu0 %v331
    %366 = vmatprep.subr.mxu0 0.0
    %367 = vmatpush1.xpose.msra.mxu0 %v334
    %368 = vmatprep.subr.mxu0 0.0
    %369 = vmatpush1.xpose.msra.mxu0 0.0
    %370 = vmatprep.subr.mxu0 0.0
    %371 = vmatpush1.xpose.msra.mxu0 0.0
    %372 = vmatprep.subr.mxu0 0.0
    %373 = vmatpush1.xpose.msra.mxu0 0.0
    %374 = vmatprep.subr.mxu0 0.0
    %375 = vmatpush1.xpose.msra.mxu0 0.0
    %376 = vmatprep.subr.mxu0 0.0
    %377 = vmatpush1.xpose.msra.mxu0 0.0
    %378 = vmatprep.subr.mxu0 0.0
    %379 = vmatpush1.xpose.msra.mxu0 0.0
    %380 = vmatprep.subr.mxu0 0.0
    %381 = vmatpush1.xpose.msra.mxu0 0.0
    %382 = vmatprep.subr.mxu0 0.0
    %383 = vmatpush1.xpose.msra.mxu0 0.0
    %384 = vmatprep.subr.mxu0 0.0
    %385 = vmatpush1.xpose.msra.mxu0 0.0
    %386 = vmatprep.subr.mxu0 0.0
    %387 = vmatpush1.xpose.msra.mxu0 0.0
    %388 = vmatprep.subr.mxu0 0.0
    %389 = vmatpush1.xpose.msra.mxu0 0.0
    %390 = vmatprep.subr.mxu0 0.0
    %391 = vmatpush1.xpose.msra.mxu0 0.0
    %392 = vmatprep.subr.mxu0 0.0
    %393 = vmatpush1.xpose.msra.mxu0 0.0
    %394 = vmatprep.subr.mxu0 0.0
    %395 = vmatpush1.xpose.msra.mxu0 0.0
    %396 = vmatprep.subr.mxu0 0.0
    %397 = vmatpush1.xpose.msra.mxu0 0.0
    %398 = vmatprep.subr.mxu0 0.0
    %399 = vmatpush1.xpose.msra.mxu0 0.0
    %400 = vmatprep.mubr.f32.mxu0 0.0
    %401 = vmatmul.mubr.f32.gmra.mrb[0].mxu0 %v277
    %v402 = vpop.f32.mrb[0].mxu0
    %v403 = vadd.f32 %v257, %v402
    %v404 = vpop.f32.mrb[0].mxu0
    %405 = vmatprep.mubr.f32.mxu0 0.0
    %406 = vmatmul.mubr.f32.gmra.mrb[0].mxu0 %v280
    %v407 = vpop.f32.mrb[0].mxu0
    %v408 = vadd.f32 %v262, %v407
    %v409 = vpop.f32.mrb[0].mxu0
    %410 = vmatprep.mubr.f32.mxu0 0.0
    %411 = vmatmul.mubr.f32.gmra.mrb[0].mxu0 %v283
    %v412 = vpop.f32.mrb[0].mxu0
    %v413 = vadd.f32 %v267, %v412
    %v414 = vpop.f32.mrb[0].mxu0
    %415 = vmatprep.mubr.f32.mxu0 0.0
    %416 = vmatmul.mubr.f32.gmra.mrb[0].mxu0 %v286
    %v417 = vpop.f32.mrb[0].mxu0
    %v418 = vadd.f32 %v272, %v417
    %v419 = vpop.f32.mrb[0].mxu0
    %420 = vdwg.mxu0
    %v422 = vsel %vm275, %v55, 0
    %v425 = vsel %vm275, %v56, 0
    %v428 = vsel %vm275, %v57, 0
    %v431 = vsel %vm275, %v58, 0
    %v434 = vsel %vm275, %v112, 0
    %v437 = vsel %vm275, %v113, 0
    %v440 = vsel %vm275, %v114, 0
    %v443 = vsel %vm275, %v115, 0
    %v446 = vsel %vm275, %v116, 0
    %v449 = vsel %vm275, %v117, 0
    %v452 = vsel %vm275, %v118, 0
    %v455 = vsel %vm275, %v119, 0
    %v458 = vsel %vm275, %v120, 0
    %v461 = vsel %vm275, %v121, 0
    %v464 = vsel %vm275, %v122, 0
    %v467 = vsel %vm275, %v123, 0
    %v470 = vsel %vm275, %v124, 0
    %v473 = vsel %vm275, %v125, 0
    %v476 = vsel %vm275, %v126, 0
    %v479 = vsel %vm275, %v127, 0
    %481 = vmatprep.subr.mxu0 0.0
    %482 = vmatpush1.xpose.msra.mxu0 %v434
    %483 = vmatprep.subr.mxu0 0.0
    %484 = vmatpush1.xpose.msra.mxu0 %v437
    %485 = vmatprep.subr.mxu0 0.0
    %486 = vmatpush1.xpose.msra.mxu0 %v440
    %487 = vmatprep.subr.mxu0 0.0
    %488 = vmatpush1.xpose.msra.mxu0 %v443
    %489 = vmatprep.subr.mxu0 0.0
    %490 = vmatpush1.xpose.msra.mxu0 %v446
    %491 = vmatprep.subr.mxu0 0.0
    %492 = vmatpush1.xpose.msra.mxu0 %v449
    %493 = vmatprep.subr.mxu0 0.0
    %494 = vmatpush1.xpose.msra.mxu0 %v452
    %495 = vmatprep.subr.mxu0 0.0
    %496 = vmatpush1.xpose.msra.mxu0 %v455
    %497 = vmatprep.subr.mxu0 0.0
    %498 = vmatpush1.xpose.msra.mxu0 %v458
    %499 = vmatprep.subr.mxu0 0.0
    %500 = vmatpush1.xpose.msra.mxu0 %v461
    %501 = vmatprep.subr.mxu0 0.0
    %502 = vmatpush1.xpose.msra.mxu0 %v464
    %503 = vmatprep.subr.mxu0 0.0
    %504 = vmatpush1.xpose.msra.mxu0 %v467
    %505 = vmatprep.subr.mxu0 0.0
    %506 = vmatpush1.xpose.msra.mxu0 %v470
    %507 = vmatprep.subr.mxu0 0.0
    %508 = vmatpush1.xpose.msra.mxu0 %v473
    %509 = vmatprep.subr.mxu0 0.0
    %510 = vmatpush1.xpose.msra.mxu0 %v476
    %511 = vmatprep.subr.mxu0 0.0
    %512 = vmatpush1.xpose.msra.mxu0 %v479
    %513 = vmatprep.subr.mxu0 0.0
    %514 = vmatpush1.xpose.msra.mxu0 0.0
    %515 = vmatprep.subr.mxu0 0.0
    %516 = vmatpush1.xpose.msra.mxu0 0.0
    %517 = vmatprep.subr.mxu0 0.0
    %518 = vmatpush1.xpose.msra.mxu0 0.0
    %519 = vmatprep.subr.mxu0 0.0
    %520 = vmatpush1.xpose.msra.mxu0 0.0
    %521 = vmatprep.subr.mxu0 0.0
    %522 = vmatpush1.xpose.msra.mxu0 0.0
    %523 = vmatprep.subr.mxu0 0.0
    %524 = vmatpush1.xpose.msra.mxu0 0.0
    %525 = vmatprep.subr.mxu0 0.0
    %526 = vmatpush1.xpose.msra.mxu0 0.0
    %527 = vmatprep.subr.mxu0 0.0
    %528 = vmatpush1.xpose.msra.mxu0 0.0
    %529 = vmatprep.subr.mxu0 0.0
    %530 = vmatpush1.xpose.msra.mxu0 0.0
    %531 = vmatprep.subr.mxu0 0.0
    %532 = vmatpush1.xpose.msra.mxu0 0.0
    %533 = vmatprep.subr.mxu0 0.0
    %534 = vmatpush1.xpose.msra.mxu0 0.0
    %535 = vmatprep.subr.mxu0 0.0
    %536 = vmatpush1.xpose.msra.mxu0 0.0
    %537 = vmatprep.subr.mxu0 0.0
    %538 = vmatpush1.xpose.msra.mxu0 0.0
    %539 = vmatprep.subr.mxu0 0.0
    %540 = vmatpush1.xpose.msra.mxu0 0.0
    %541 = vmatprep.subr.mxu0 0.0
    %542 = vmatpush1.xpose.msra.mxu0 0.0
    %543 = vmatprep.subr.mxu0 0.0
    %544 = vmatpush1.xpose.msra.mxu0 0.0
    %545 = vmatprep.mubr.f32.mxu0 0.0
    %546 = vmatmul.mubr.f32.gmra.mrb[0].mxu0 %v422
    %v547 = vpop.f32.mrb[0].mxu0
    %v548 = vadd.f32 0.0, %v547
    %v549 = vpop.f32.mrb[0].mxu0
    %550 = vmatprep.mubr.f32.mxu0 0.0
    %551 = vmatmul.mubr.f32.gmra.mrb[0].mxu0 %v425
    %v552 = vpop.f32.mrb[0].mxu0
    %v553 = vadd.f32 0.0, %v552
    %v554 = vpop.f32.mrb[0].mxu0
    %555 = vmatprep.mubr.f32.mxu0 0.0
    %556 = vmatmul.mubr.f32.gmra.mrb[0].mxu0 %v428
    %v557 = vpop.f32.mrb[0].mxu0
    %v558 = vadd.f32 0.0, %v557
    %v559 = vpop.f32.mrb[0].mxu0
    %560 = vmatprep.mubr.f32.mxu0 0.0
    %561 = vmatmul.mubr.f32.gmra.mrb[0].mxu0 %v431
    %v562 = vpop.f32.mrb[0].mxu0
    %v563 = vadd.f32 0.0, %v562
    %v564 = vpop.f32.mrb[0].mxu0
    %565 = vdwg.mxu0
    %v566 = vadd.f32 %v403, %v548
    %v567 = vadd.f32 %v408, %v553
    %v568 = vadd.f32 %v413, %v558
    %v569 = vadd.f32 %v418, %v563
    %571 = vset.pattern.permute.xlu0 0
    %572 = vperm.xlu0 %571, %v59
    %v573 = vpop.permute.xlu0 %572
    %576 = vset.pattern.permute.xlu0 0
    %577 = vperm.xlu0 %576, %v60
    %v578 = vpop.permute.xlu0 %577
    %581 = vset.pattern.permute.xlu0 0
    %582 = vperm.xlu0 %581, %v61
    %v583 = vpop.permute.xlu0 %582
    %586 = vset.pattern.permute.xlu0 0
    %587 = vperm.xlu0 %586, %v62
    %v588 = vpop.permute.xlu0 %587
    %v591 = vlaneseq
    %v592 = vshrl.u32 %v591, 7
    %v593 = vsub.s32 0, %v592
    %v594 = vrot.slane %v128, %v593
    %v596 = vmul.f32 %v573, %v594
    %v597 = vmul.f32 %v578, %v594
    %v598 = vmul.f32 %v583, %v594
    %v599 = vmul.f32 %v588, %v594
    %v600 = vadd.f32 %v566, %v596
    %v601 = vadd.f32 %v567, %v597
    %v602 = vadd.f32 %v568, %v598
    %v603 = vadd.f32 %v569, %v599
    %605 = vset.pattern.permute.xlu0 0
    %606 = vperm.xlu0 %605, %v63
    %v607 = vpop.permute.xlu0 %606
    %610 = vset.pattern.permute.xlu0 0
    %611 = vperm.xlu0 %610, %v64
    %v612 = vpop.permute.xlu0 %611
    %615 = vset.pattern.permute.xlu0 0
    %616 = vperm.xlu0 %615, %v65
    %v617 = vpop.permute.xlu0 %616
    %620 = vset.pattern.permute.xlu0 0
    %621 = vperm.xlu0 %620, %v66
    %v622 = vpop.permute.xlu0 %621
    %v624 = vadd.f32 %v600, %v607
    %v625 = vadd.f32 %v601, %v612
    %v626 = vadd.f32 %v602, %v617
    %v627 = vadd.f32 %v603, %v622
    %v628 = vmax.f32 %v624, 0.0
    %v629 = vmax.f32 %v625, 0.0
    %v630 = vmax.f32 %v626, 0.0
    %v631 = vmax.f32 %v627, 0.0
    %633 = vset.pattern.permute.xlu0 0
    %634 = vperm.xlu0 %633, %v71
    %v635 = vpop.permute.xlu0 %634
    %638 = vset.pattern.permute.xlu0 0
    %639 = vperm.xlu0 %638, %v72
    %v640 = vpop.permute.xlu0 %639
    %643 = vset.pattern.permute.xlu0 0
    %644 = vperm.xlu0 %643, %v73
    %v645 = vpop.permute.xlu0 %644
    %648 = vset.pattern.permute.xlu0 0
    %649 = vperm.xlu0 %648, %v74
    %v650 = vpop.permute.xlu0 %649
    %vm652 = vcmask 261120
    %v654 = vsel %vm652, %v67, 0
    %v657 = vsel %vm652, %v68, 0
    %v660 = vsel %vm652, %v69, 0
    %v663 = vsel %vm652, %v70, 0
    %665 = vmatprep.subr.mxu0 0.0
    %666 = vmatpush1.msra.mxu0 %v628
    %667 = vmatprep.subr.mxu0 0.0
    %668 = vmatpush1.msra.mxu0 %v629
    %669 = vmatprep.subr.mxu0 0.0
    %670 = vmatpush1.msra.mxu0 %v630
    %671 = vmatprep.subr.mxu0 0.0
    %672 = vmatpush1.msra.mxu0 %v631
    %673 = vmatprep.subr.mxu0 0.0
    %674 = vmatpush1.msra.mxu0 0.0
    %675 = vmatprep.subr.mxu0 0.0
    %676 = vmatpush1.msra.mxu0 0.0
    %677 = vmatprep.subr.mxu0 0.0
    %678 = vmatpush1.msra.mxu0 0.0
    %679 = vmatprep.subr.mxu0 0.0
    %680 = vmatpush1.msra.mxu0 0.0
    %681 = vmatprep.subr.mxu0 0.0
    %682 = vmatpush1.msra.mxu0 0.0
    %683 = vmatprep.subr.mxu0 0.0
    %684 = vmatpush1.msra.mxu0 0.0
    %685 = vmatprep.subr.mxu0 0.0
    %686 = vmatpush1.msra.mxu0 0.0
    %687 = vmatprep.subr.mxu0 0.0
    %688 = vmatpush1.msra.mxu0 0.0
    %689 = vmatprep.subr.mxu0 0.0
    %690 = vmatpush1.msra.mxu0 0.0
    %691 = vmatprep.subr.mxu0 0.0
    %692 = vmatpush1.msra.mxu0 0.0
    %693 = vmatprep.subr.mxu0 0.0
    %694 = vmatpush1.msra.mxu0 0.0
    %695 = vmatprep.subr.mxu0 0.0
    %696 = vmatpush1.msra.mxu0 0.0
    %697 = vmatprep.subr.mxu0 0.0
    %698 = vmatpush1.msra.mxu0 0.0
    %699 = vmatprep.subr.mxu0 0.0
    %700 = vmatpush1.msra.mxu0 0.0
    %701 = vmatprep.subr.mxu0 0.0
    %702 = vmatpush1.msra.mxu0 0.0
    %703 = vmatprep.subr.mxu0 0.0
    %704 = vmatpush1.msra.mxu0 0.0
    %705 = vmatprep.subr.mxu0 0.0
    %706 = vmatpush1.msra.mxu0 0.0
    %707 = vmatprep.subr.mxu0 0.0
    %708 = vmatpush1.msra.mxu0 0.0
    %709 = vmatprep.subr.mxu0 0.0
    %710 = vmatpush1.msra.mxu0 0.0
    %711 = vmatprep.subr.mxu0 0.0
    %712 = vmatpush1.msra.mxu0 0.0
    %713 = vmatprep.subr.mxu0 0.0
    %714 = vmatpush1.msra.mxu0 0.0
    %715 = vmatprep.subr.mxu0 0.0
    %716 = vmatpush1.msra.mxu0 0.0
    %717 = vmatprep.subr.mxu0 0.0
    %718 = vmatpush1.msra.mxu0 0.0
    %719 = vmatprep.subr.mxu0 0.0
    %720 = vmatpush1.msra.mxu0 0.0
    %721 = vmatprep.subr.mxu0 0.0
    %722 = vmatpush1.msra.mxu0 0.0
    %723 = vmatprep.subr.mxu0 0.0
    %724 = vmatpush1.msra.mxu0 0.0
    %725 = vmatprep.subr.mxu0 0.0
    %726 = vmatpush1.msra.mxu0 0.0
    %727 = vmatprep.subr.mxu0 0.0
    %728 = vmatpush1.msra.mxu0 0.0
    %729 = vmatprep.mubr.f32.mxu0 0.0
    %730 = vmatmul.mubr.f32.gmra.mrb[0].mxu0 %v654
    %v731 = vpop.f32.mrb[0].mxu0
    %v732 = vadd.f32 %v635, %v731
    %v733 = vpop.f32.mrb[0].mxu0
    %734 = vmatprep.mubr.f32.mxu0 0.0
    %735 = vmatmul.mubr.f32.gmra.mrb[0].mxu0 %v657
    %v736 = vpop.f32.mrb[0].mxu0
    %v737 = vadd.f32 %v640, %v736
    %v738 = vpop.f32.mrb[0].mxu0
    %739 = vmatprep.mubr.f32.mxu0 0.0
    %740 = vmatmul.mubr.f32.gmra.mrb[0].mxu0 %v660
    %v741 = vpop.f32.mrb[0].mxu0
    %v742 = vadd.f32 %v645, %v741
    %v743 = vpop.f32.mrb[0].mxu0
    %744 = vmatprep.mubr.f32.mxu0 0.0
    %745 = vmatmul.mubr.f32.gmra.mrb[0].mxu0 %v663
    %v746 = vpop.f32.mrb[0].mxu0
    %v747 = vadd.f32 %v650, %v746
    %v748 = vpop.f32.mrb[0].mxu0
    %749 = vdwg.mxu0
    %v750 = vmax.f32 %v732, 0.0
    %v751 = vmax.f32 %v737, 0.0
    %v752 = vmax.f32 %v742, 0.0
    %v753 = vmax.f32 %v747, 0.0
    %755 = vset.pattern.permute.xlu0 0
    %756 = vperm.xlu0 %755, %v75
    %v757 = vpop.permute.xlu0 %756
    %760 = vset.pattern.permute.xlu0 0
    %761 = vperm.xlu0 %760, %v76
    %v762 = vpop.permute.xlu0 %761
    %765 = vset.pattern.permute.xlu0 0
    %766 = vperm.xlu0 %765, %v77
    %v767 = vpop.permute.xlu0 %766
    %770 = vset.pattern.permute.xlu0 0
    %771 = vperm.xlu0 %770, %v78
    %v772 = vpop.permute.xlu0 %771
    %v774 = vmul.f32 %v757, %v750
    %v775 = vmul.f32 %v762, %v751
    %v776 = vmul.f32 %v767, %v752
    %v777 = vmul.f32 %v772, %v753
    %v778 = vadd.f32 %v774, %v775
    %v779 = vadd.f32 %v778, %v776
    %v780 = vadd.f32 %v779, %v777
    %v781 = vrot.slane %v780, 4
    %v782 = vadd.f32 %v780, %v781
    %v783 = vrot.slane %v782, 2
    %v784 = vadd.f32 %v782, %v783
    %v785 = vrot.slane %v784, 1
    %v786 = vadd.f32 %v784, %v785
    %788 = vset.pattern.permute.xlu0 0
    %789 = vperm.xlu0 %788, %v79
    %v790 = vpop.permute.xlu0 %789
    %v792 = vlaneseq
    %v793 = vshrl.u32 %v792, 7
    %v794 = vsub.s32 0, %v793
    %v795 = vrot.slane %v790, %v794
    %v796 = vadd.f32 %v786, %v795
    %797 = vst [vmem:[#allocation3] sm:$0x1] %v796
    // Predicated region
    $region54: #{tpu_custom_call.1} parent=1 // pred_check
      _
    $region55: #{tpu_custom_call.1} parent=1 // pred_check_branch
      %799 = sbr.rel (0) target = $region57
    $region56: #{tpu_custom_call.1} parent=1 // pred_region
      %s801 = ssub.s32 16, 16
      %802 = vsyncadd [#allocation4], %s801
      %s804 = sshll.u32 [#allocation3], 4
      %s805 = int_to_ptr.vmem [resolvable:$true] %s804
      %807 = dma.vmem_to_hbm [thread:$0]  %s805, 16, %s13, [#allocation4]
    $region57: #{tpu_custom_call.1} parent=1 // pred_fallthru
      _
    // Predicated region
    $region58: #{tpu_custom_call.1} parent=1 // pred_check
      _
    $region59: #{tpu_custom_call.1} parent=1 // pred_check_branch
      %809 = sbr.rel (0) target = $region61
    $region60: #{tpu_custom_call.1} parent=1 // pred_region
      %810 = dma.done [#allocation4], 16
    $region61: #{tpu_custom_call.1} parent=1 // pred_fallthru
      _
    %811 = vsyncpa [#allocation4], 1

</llo_original>
